<compile_context>
chip_gen: v6e
topology: v6e:2x2x1
jax: 0.10.0
libtpu: 0.0.40
codegen_flags: <defaults>
</compile_context>

<pallas_src>
import jax
import jax.numpy as jnp
from jax.experimental import pallas as pl
from jax.experimental.pallas import tpu as pltpu

LANE = 128


def _round_up(n, m):
    return ((n + m - 1) // m) * m


def _cdiv(a, b):
    return -(-a // b)


def _num_tensorcores():
    """Best-effort TensorCores-per-chip (v7x: 2, v5e/v6e: 1). Safe fallback 1."""
    try:
        info = pltpu.get_tpu_info()
        for name in ("num_tensorcores", "tensorcores_per_chip", "num_cores",
                     "cores_per_chip"):
            v = getattr(info, name, None)
            if isinstance(v, int) and v > 0:
                return 2 if v >= 2 else 1
    except Exception:
        pass
    try:
        kind = jax.devices()[0].device_kind.lower()
        if "v7" in kind or "tpu7" in kind:
            return 2
    except Exception:
        pass
    return 1


def bow_kernel(x_ref, wfc_ref, bfc_ref, wproj_ref, bproj_ref,
               whead_ref, bhead_ref, out_ref, xs_ref):
    """One grid step: Bb batch elements, all T positions.

    x_ref : (T, Bb, C) f32, T-major so the causal prefix sum walks the leading
            (untiled) axis with plain `ref[t]` loads.
    xs_ref: (T, Bb, C) f32 VMEM scratch holding x + causal_average(x).
    """
    T = x_ref.shape[0]
    Bb, C = x_ref.shape[1], x_ref.shape[2]
    cd = wfc_ref.dtype

    # Causal bag-of-words average: y[t] = mean(x[0..t]).  Running prefix sum
    # over the leading axis (a handful of VPU adds; T is small & static) —
    # replaces the old batched (TxT) matmul and its broadcast/att input.
    acc = x_ref[0]
    xs_ref[0] = acc + acc                       # x[0] + y[0], y[0] == x[0]
    for t in range(1, T):                       # static unroll (T known at trace)
        xt = x_ref[t]
        acc = acc + xt
        xs_ref[t] = xt + acc * (1.0 / (t + 1.0))

    # Residual stream flattened to M = T*Bb rows so the MLP / head matmuls see
    # a long M dimension on the MXU.
    x1 = xs_ref[...].reshape(T * Bb, C)                           # (M, C) f32

    # MLP: x2 = x1 + c_proj(tanh(c_fc(x1))); f32 accumulation & activations.
    h = jnp.tanh(jnp.dot(x1.astype(cd), wfc_ref[...],
                         preferred_element_type=jnp.float32) + bfc_ref[...])
    mlp = jnp.dot(h.astype(cd), wproj_ref[...],
                  preferred_element_type=jnp.float32) + bproj_ref[...]
    x2 = x1 + mlp

    # lm_head. Vp is a multiple of 128 -> lane-dense unmasked stores; emitted
    # in the compute dtype (bf16 on the MXU path) to halve HBM writeback.
    logits = jnp.dot(x2.astype(cd), whead_ref[...],
                     preferred_element_type=jnp.float32) + bhead_ref[...]
    out_ref[...] = logits.astype(out_ref.dtype)


def prepare_bow_params(wte, wpe, w_fc, b_fc, w_proj, b_proj, w_head, b_head,
                       *, compute_dtype=jnp.bfloat16):
    """One-time (init-time) weight padding / casting — hoisted out of forward.

    compute_dtype=bfloat16: MXU-friendly on v6e/v7x.  compute_dtype=float32:
    exact path (preferred on v5e; slower on v6e/v7x where f32 matmul is
    emulated in multiple bf16 passes).
    """
    V, C = wte.shape
    H = w_fc.shape[1]
    cd = jnp.dtype(compute_dtype)
    Hp = _round_up(H, LANE)
    Vp = _round_up(V, LANE)

    w_fc_p = jnp.zeros((C, Hp), cd).at[:, :H].set(w_fc.astype(cd))
    w_proj_p = jnp.zeros((Hp, C), cd).at[:H, :].set(w_proj.astype(cd))
    w_head_p = jnp.zeros((C, Vp), cd).at[:, :V].set(w_head.astype(cd))
    b_fc_p = jnp.zeros((1, Hp), jnp.float32).at[0, :H].set(b_fc.astype(jnp.float32))
    b_proj_p = b_proj.astype(jnp.float32).reshape(1, C)
    b_head_p = jnp.zeros((1, Vp), jnp.float32).at[0, :V].set(b_head.astype(jnp.float32))

    return dict(wte=wte.astype(jnp.float32), wpe=wpe.astype(jnp.float32),
                w_fc_p=w_fc_p, b_fc_p=b_fc_p, w_proj_p=w_proj_p,
                b_proj_p=b_proj_p, w_head_p=w_head_p, b_head_p=b_head_p,
                V=V, C=C, H=H, Hp=Hp, Vp=Vp, compute_dtype=cd)


def bow_forward(idx, params, *, rows_target=2048):
    """Embedding lookup in JAX glue + Pallas kernel for the hot path."""
    B, T = idx.shape
    V, C = params["V"], params["C"]
    Hp, Vp = params["Hp"], params["Vp"]
    cd = params["compute_dtype"]

    # Embedding lookups (gathers) — plain JAX glue.
    # TODO(synk): could be fused into the kernel via a one-hot @ wte matmul
    # (the table is tiny); gathers have no direct Pallas TPU vector op.
    x = jnp.take(params["wte"], idx, axis=0) + params["wpe"][:T][None]  # (B,T,C) f32

    # Generation-aware batch blocking: one step on single-TC chips, an even
    # number of steps on dual-TC v7x; Bb kept sublane-aligned (multiple of 8).
    n_tc = _num_tensorcores()
    bb_cap = max(1, rows_target // T)
    bb = min(_cdiv(B, n_tc), bb_cap) if (n_tc > 1 and B > 1) else min(B, bb_cap)
    Bb = _round_up(bb, 8)
    num_steps = _cdiv(B, Bb)
    if n_tc > 1:
        num_steps = _round_up(num_steps, n_tc)   # even split across TensorCores
    B_pad = num_steps * Bb
    M = T * Bb

    # T-major layout so the in-kernel prefix sum indexes the leading axis;
    # batch zero-padded to whole blocks.  x stays f32 (no bf16 truncation of
    # the residual stream before the kernel) and C stays unpadded.
    x = jnp.transpose(x, (1, 0, 2))                                  # (T, B, C)
    if B_pad > B:
        x = jnp.pad(x, ((0, 0), (0, B_pad - B), (0, 0)))

    out_dtype = jnp.float32 if cd == jnp.dtype(jnp.float32) else jnp.bfloat16
    const2 = lambda i: (0, 0)

    out = pl.pallas_call(
        bow_kernel,
        out_shape=jax.ShapeDtypeStruct((num_steps * M, Vp), out_dtype),
        grid_spec=pltpu.PrefetchScalarGridSpec(
            num_scalar_prefetch=0,
            grid=(num_steps,),
            in_specs=[
                pl.BlockSpec((T, Bb, C), lambda i: (0, i, 0)),   # x (unpadded C)
                pl.BlockSpec((C, Hp), const2),                   # W_fc
                pl.BlockSpec((1, Hp), const2),                   # b_fc
                pl.BlockSpec((Hp, C), const2),                   # W_proj
                pl.BlockSpec((1, C), const2),                    # b_proj
                pl.BlockSpec((C, Vp), const2),                   # W_head
                pl.BlockSpec((1, Vp), const2),                   # b_head
            ],
            out_specs=pl.BlockSpec((M, Vp), lambda i: (i, 0)),   # lane-dense
            scratch_shapes=[pltpu.VMEM((T, Bb, C), jnp.float32)],
        ),
        compiler_params=pltpu.CompilerParams(
            dimension_semantics=("parallel",)),
    )(x, params["w_fc_p"], params["b_fc_p"], params["w_proj_p"],
      params["b_proj_p"], params["w_head_p"], params["b_head_p"])

    # Un-scramble the (step, t, b_local) row order and drop padding.
    out = out.reshape(num_steps, T, Bb, Vp).transpose(0, 2, 1, 3)
    logits = out.reshape(B_pad, T, Vp)[:B, :, :V]
    # TODO(synk): cross-entropy loss branch (targets != None) stays in JAX-land.
    return logits


def _reference(idx, wte, wpe, w_fc, b_fc, w_proj, b_proj, w_head, b_head):
    """Pure-JAX reference (HIGHEST matmul precision) for the sanity check."""
    P = jax.lax.Precision.HIGHEST
    T = idx.shape[1]
    x = jnp.take(wte, idx, axis=0) + wpe[:T][None]
    rows = jnp.arange(T, dtype=jnp.float32)[:, None]
    cols = jnp.arange(T, dtype=jnp.float32)[None, :]
    att = jnp.where(cols <= rows, 1.0 / (rows + 1.0), 0.0)
    y = jnp.einsum("tk,bkc->btc", att, x, precision=P)
    x = x + y
    h = jnp.tanh(jnp.dot(x, w_fc, precision=P) + b_fc)
    x = x + jnp.dot(h, w_proj, precision=P) + b_proj
    return jnp.dot(x, w_head, precision=P) + b_head


if __name__ == "__main__":
    # Small config consistent with the module:
    vocab_size = 16
    block_size = 8
    n_embd = 32
    n_embd2 = 64
    B, T = 2, block_size

    key = jax.random.PRNGKey(0)
    ks = jax.random.split(key, 9)

    wte = jax.random.normal(ks[0], (vocab_size, n_embd), jnp.float32) * 0.02
    wpe = jax.random.normal(ks[1], (block_size, n_embd), jnp.float32) * 0.02
    w_fc = jax.random.normal(ks[2], (n_embd, n_embd2), jnp.float32) * 0.1
    b_fc = jax.random.normal(ks[3], (n_embd2,), jnp.float32) * 0.01
    w_proj = jax.random.normal(ks[4], (n_embd2, n_embd), jnp.float32) * 0.1
    b_proj = jax.random.normal(ks[5], (n_embd,), jnp.float32) * 0.01
    w_head = jax.random.normal(ks[6], (n_embd, vocab_size), jnp.float32) * 0.1
    b_head = jax.random.normal(ks[7], (vocab_size,), jnp.float32) * 0.01

    idx = jax.random.randint(ks[8], (B, T), 0, vocab_size, dtype=jnp.int32)

    # Init-time (one-off) padded/cast parameter bundles.
    params_bf16 = prepare_bow_params(wte, wpe, w_fc, b_fc, w_proj, b_proj,
                                     w_head, b_head, compute_dtype=jnp.bfloat16)
    params_f32 = prepare_bow_params(wte, wpe, w_fc, b_fc, w_proj, b_proj,
                                    w_head, b_head, compute_dtype=jnp.float32)

    logits_bf16 = jax.block_until_ready(bow_forward(idx, params_bf16))
    logits_f32 = jax.block_until_ready(bow_forward(idx, params_f32))

    ref = _reference(idx, wte, wpe, w_fc, b_fc, w_proj, b_proj, w_head, b_head)

    assert logits_bf16.shape == (B, T, vocab_size)
    assert logits_f32.shape == (B, T, vocab_size)
    assert jnp.allclose(logits_f32, ref, atol=1e-4, rtol=1e-4)
    assert jnp.allclose(logits_bf16.astype(jnp.float32), ref, atol=2e-2, rtol=2e-2)

    print("KERNEL_OK")
</pallas_src>

<mosaic_0001>
module attributes {stable_mosaic.version = 11 : i64} {
  func.func @bow_kernel(%arg0: i32, %arg1: memref<8x8x32xf32, #tpu.memory_space<vmem>>, %arg2: memref<32x128xbf16, #tpu.memory_space<vmem>>, %arg3: memref<1x128xf32, #tpu.memory_space<vmem>>, %arg4: memref<128x32xbf16, #tpu.memory_space<vmem>>, %arg5: memref<1x32xf32, #tpu.memory_space<vmem>>, %arg6: memref<32x128xbf16, #tpu.memory_space<vmem>>, %arg7: memref<1x128xf32, #tpu.memory_space<vmem>>, %arg8: memref<64x128xbf16, #tpu.memory_space<vmem>>, %arg9: memref<8x8x32xf32, #tpu.memory_space<vmem>>) attributes {dimension_semantics = [#tpu.dimension_semantics<parallel>], iteration_bounds = array<i64: 1>, scalar_prefetch = 0 : i64, scratch_operands = 1 : i64, tpu.core_type = #tpu.core_type<tc>, window_params = [{transform_indices = @transform_0, window_bounds = array<i64: 8, 8, 32>}, {pipeline_mode = #tpu.pipeline_mode<synchronous>, transform_indices = @transform_1, window_bounds = array<i64: 32, 128>}, {pipeline_mode = #tpu.pipeline_mode<synchronous>, transform_indices = @transform_2, window_bounds = array<i64: 1, 128>}, {pipeline_mode = #tpu.pipeline_mode<synchronous>, transform_indices = @transform_3, window_bounds = array<i64: 128, 32>}, {pipeline_mode = #tpu.pipeline_mode<synchronous>, transform_indices = @transform_4, window_bounds = array<i64: 1, 32>}, {pipeline_mode = #tpu.pipeline_mode<synchronous>, transform_indices = @transform_5, window_bounds = array<i64: 32, 128>}, {pipeline_mode = #tpu.pipeline_mode<synchronous>, transform_indices = @transform_6, window_bounds = array<i64: 1, 128>}, {transform_indices = @transform_7, window_bounds = array<i64: 64, 128>}]} {
    %c0 = arith.constant 0 : index
    %c0_0 = arith.constant 0 : index
    %c0_1 = arith.constant 0 : index
    %0 = vector.load %arg1[%c0, %c0_0, %c0_1] : memref<8x8x32xf32, #tpu.memory_space<vmem>>, vector<1x8x32xf32>
    %1 = vector.shape_cast %0 : vector<1x8x32xf32> to vector<8x32xf32>
    %2 = arith.addf %1, %1 : vector<8x32xf32>
    %c0_2 = arith.constant 0 : index
    %c0_3 = arith.constant 0 : index
    %c0_4 = arith.constant 0 : index
    %3 = vector.load %arg9[%c0_2, %c0_3, %c0_4] : memref<8x8x32xf32, #tpu.memory_space<vmem>>, vector<1x8x32xf32>
    %4 = vector.shape_cast %3 : vector<1x8x32xf32> to vector<8x32xf32>
    %5 = vector.shape_cast %2 : vector<8x32xf32> to vector<1x8x32xf32>
    tpu.vector_store %arg9[%c0_2, %c0_3, %c0_4], %5 {strides = array<i32>} : memref<8x8x32xf32, #tpu.memory_space<vmem>>, vector<1x8x32xf32>,
    %c1 = arith.constant 1 : index
    %c0_5 = arith.constant 0 : index
    %c0_6 = arith.constant 0 : index
    %6 = vector.load %arg1[%c1, %c0_5, %c0_6] : memref<8x8x32xf32, #tpu.memory_space<vmem>>, vector<1x8x32xf32>
    %7 = vector.shape_cast %6 : vector<1x8x32xf32> to vector<8x32xf32>
    %8 = arith.addf %1, %7 : vector<8x32xf32>
    %cst = arith.constant 5.000000e-01 : f32
    %9 = vector.broadcast %cst : f32 to vector<8x32xf32>
    %10 = arith.mulf %8, %9 : vector<8x32xf32>
    %11 = arith.addf %7, %10 : vector<8x32xf32>
    %c1_7 = arith.constant 1 : index
    %c0_8 = arith.constant 0 : index
    %c0_9 = arith.constant 0 : index
    %12 = vector.load %arg9[%c1_7, %c0_8, %c0_9] : memref<8x8x32xf32, #tpu.memory_space<vmem>>, vector<1x8x32xf32>
    %13 = vector.shape_cast %12 : vector<1x8x32xf32> to vector<8x32xf32>
    %14 = vector.shape_cast %11 : vector<8x32xf32> to vector<1x8x32xf32>
    tpu.vector_store %arg9[%c1_7, %c0_8, %c0_9], %14 {strides = array<i32>} : memref<8x8x32xf32, #tpu.memory_space<vmem>>, vector<1x8x32xf32>,
    %c2 = arith.constant 2 : index
    %c0_10 = arith.constant 0 : index
    %c0_11 = arith.constant 0 : index
    %15 = vector.load %arg1[%c2, %c0_10, %c0_11] : memref<8x8x32xf32, #tpu.memory_space<vmem>>, vector<1x8x32xf32>
    %16 = vector.shape_cast %15 : vector<1x8x32xf32> to vector<8x32xf32>
    %17 = arith.addf %8, %16 : vector<8x32xf32>
    %cst_12 = arith.constant 0.333333343 : f32
    %18 = vector.broadcast %cst_12 : f32 to vector<8x32xf32>
    %19 = arith.mulf %17, %18 : vector<8x32xf32>
    %20 = arith.addf %16, %19 : vector<8x32xf32>
    %c2_13 = arith.constant 2 : index
    %c0_14 = arith.constant 0 : index
    %c0_15 = arith.constant 0 : index
    %21 = vector.load %arg9[%c2_13, %c0_14, %c0_15] : memref<8x8x32xf32, #tpu.memory_space<vmem>>, vector<1x8x32xf32>
    %22 = vector.shape_cast %21 : vector<1x8x32xf32> to vector<8x32xf32>
    %23 = vector.shape_cast %20 : vector<8x32xf32> to vector<1x8x32xf32>
    tpu.vector_store %arg9[%c2_13, %c0_14, %c0_15], %23 {strides = array<i32>} : memref<8x8x32xf32, #tpu.memory_space<vmem>>, vector<1x8x32xf32>,
    %c3 = arith.constant 3 : index
    %c0_16 = arith.constant 0 : index
    %c0_17 = arith.constant 0 : index
    %24 = vector.load %arg1[%c3, %c0_16, %c0_17] : memref<8x8x32xf32, #tpu.memory_space<vmem>>, vector<1x8x32xf32>
    %25 = vector.shape_cast %24 : vector<1x8x32xf32> to vector<8x32xf32>
    %26 = arith.addf %17, %25 : vector<8x32xf32>
    %cst_18 = arith.constant 2.500000e-01 : f32
    %27 = vector.broadcast %cst_18 : f32 to vector<8x32xf32>
    %28 = arith.mulf %26, %27 : vector<8x32xf32>
    %29 = arith.addf %25, %28 : vector<8x32xf32>
    %c3_19 = arith.constant 3 : index
    %c0_20 = arith.constant 0 : index
    %c0_21 = arith.constant 0 : index
    %30 = vector.load %arg9[%c3_19, %c0_20, %c0_21] : memref<8x8x32xf32, #tpu.memory_space<vmem>>, vector<1x8x32xf32>
    %31 = vector.shape_cast %30 : vector<1x8x32xf32> to vector<8x32xf32>
    %32 = vector.shape_cast %29 : vector<8x32xf32> to vector<1x8x32xf32>
    tpu.vector_store %arg9[%c3_19, %c0_20, %c0_21], %32 {strides = array<i32>} : memref<8x8x32xf32, #tpu.memory_space<vmem>>, vector<1x8x32xf32>,
    %c4 = arith.constant 4 : index
    %c0_22 = arith.constant 0 : index
    %c0_23 = arith.constant 0 : index
    %33 = vector.load %arg1[%c4, %c0_22, %c0_23] : memref<8x8x32xf32, #tpu.memory_space<vmem>>, vector<1x8x32xf32>
    %34 = vector.shape_cast %33 : vector<1x8x32xf32> to vector<8x32xf32>
    %35 = arith.addf %26, %34 : vector<8x32xf32>
    %cst_24 = arith.constant 2.000000e-01 : f32
    %36 = vector.broadcast %cst_24 : f32 to vector<8x32xf32>
    %37 = arith.mulf %35, %36 : vector<8x32xf32>
    %38 = arith.addf %34, %37 : vector<8x32xf32>
    %c4_25 = arith.constant 4 : index
    %c0_26 = arith.constant 0 : index
    %c0_27 = arith.constant 0 : index
    %39 = vector.load %arg9[%c4_25, %c0_26, %c0_27] : memref<8x8x32xf32, #tpu.memory_space<vmem>>, vector<1x8x32xf32>
    %40 = vector.shape_cast %39 : vector<1x8x32xf32> to vector<8x32xf32>
    %41 = vector.shape_cast %38 : vector<8x32xf32> to vector<1x8x32xf32>
    tpu.vector_store %arg9[%c4_25, %c0_26, %c0_27], %41 {strides = array<i32>} : memref<8x8x32xf32, #tpu.memory_space<vmem>>, vector<1x8x32xf32>,
    %c5 = arith.constant 5 : index
    %c0_28 = arith.constant 0 : index
    %c0_29 = arith.constant 0 : index
    %42 = vector.load %arg1[%c5, %c0_28, %c0_29] : memref<8x8x32xf32, #tpu.memory_space<vmem>>, vector<1x8x32xf32>
    %43 = vector.shape_cast %42 : vector<1x8x32xf32> to vector<8x32xf32>
    %44 = arith.addf %35, %43 : vector<8x32xf32>
    %cst_30 = arith.constant 0.166666672 : f32
    %45 = vector.broadcast %cst_30 : f32 to vector<8x32xf32>
    %46 = arith.mulf %44, %45 : vector<8x32xf32>
    %47 = arith.addf %43, %46 : vector<8x32xf32>
    %c5_31 = arith.constant 5 : index
    %c0_32 = arith.constant 0 : index
    %c0_33 = arith.constant 0 : index
    %48 = vector.load %arg9[%c5_31, %c0_32, %c0_33] : memref<8x8x32xf32, #tpu.memory_space<vmem>>, vector<1x8x32xf32>
    %49 = vector.shape_cast %48 : vector<1x8x32xf32> to vector<8x32xf32>
    %50 = vector.shape_cast %47 : vector<8x32xf32> to vector<1x8x32xf32>
    tpu.vector_store %arg9[%c5_31, %c0_32, %c0_33], %50 {strides = array<i32>} : memref<8x8x32xf32, #tpu.memory_space<vmem>>, vector<1x8x32xf32>,
    %c6 = arith.constant 6 : index
    %c0_34 = arith.constant 0 : index
    %c0_35 = arith.constant 0 : index
    %51 = vector.load %arg1[%c6, %c0_34, %c0_35] : memref<8x8x32xf32, #tpu.memory_space<vmem>>, vector<1x8x32xf32>
    %52 = vector.shape_cast %51 : vector<1x8x32xf32> to vector<8x32xf32>
    %53 = arith.addf %44, %52 : vector<8x32xf32>
    %cst_36 = arith.constant 0.142857149 : f32
    %54 = vector.broadcast %cst_36 : f32 to vector<8x32xf32>
    %55 = arith.mulf %53, %54 : vector<8x32xf32>
    %56 = arith.addf %52, %55 : vector<8x32xf32>
    %c6_37 = arith.constant 6 : index
    %c0_38 = arith.constant 0 : index
    %c0_39 = arith.constant 0 : index
    %57 = vector.load %arg9[%c6_37, %c0_38, %c0_39] : memref<8x8x32xf32, #tpu.memory_space<vmem>>, vector<1x8x32xf32>
    %58 = vector.shape_cast %57 : vector<1x8x32xf32> to vector<8x32xf32>
    %59 = vector.shape_cast %56 : vector<8x32xf32> to vector<1x8x32xf32>
    tpu.vector_store %arg9[%c6_37, %c0_38, %c0_39], %59 {strides = array<i32>} : memref<8x8x32xf32, #tpu.memory_space<vmem>>, vector<1x8x32xf32>,
    %c7 = arith.constant 7 : index
    %c0_40 = arith.constant 0 : index
    %c0_41 = arith.constant 0 : index
    %60 = vector.load %arg1[%c7, %c0_40, %c0_41] : memref<8x8x32xf32, #tpu.memory_space<vmem>>, vector<1x8x32xf32>
    %61 = vector.shape_cast %60 : vector<1x8x32xf32> to vector<8x32xf32>
    %62 = arith.addf %53, %61 : vector<8x32xf32>
    %cst_42 = arith.constant 1.250000e-01 : f32
    %63 = vector.broadcast %cst_42 : f32 to vector<8x32xf32>
    %64 = arith.mulf %62, %63 : vector<8x32xf32>
    %65 = arith.addf %61, %64 : vector<8x32xf32>
    %c7_43 = arith.constant 7 : index
    %c0_44 = arith.constant 0 : index
    %c0_45 = arith.constant 0 : index
    %66 = vector.load %arg9[%c7_43, %c0_44, %c0_45] : memref<8x8x32xf32, #tpu.memory_space<vmem>>, vector<1x8x32xf32>
    %67 = vector.shape_cast %66 : vector<1x8x32xf32> to vector<8x32xf32>
    %68 = vector.shape_cast %65 : vector<8x32xf32> to vector<1x8x32xf32>
    tpu.vector_store %arg9[%c7_43, %c0_44, %c0_45], %68 {strides = array<i32>} : memref<8x8x32xf32, #tpu.memory_space<vmem>>, vector<1x8x32xf32>,
    %c0_46 = arith.constant 0 : index
    %c0_47 = arith.constant 0 : index
    %c0_48 = arith.constant 0 : index
    %69 = vector.load %arg9[%c0_46, %c0_47, %c0_48] : memref<8x8x32xf32, #tpu.memory_space<vmem>>, vector<8x8x32xf32>
    %70 = vector.shape_cast %69 : vector<8x8x32xf32> to vector<64x32xf32>
    %71 = arith.truncf %70 : vector<64x32xf32> to vector<64x32xbf16>
    %c0_49 = arith.constant 0 : index
    %c0_50 = arith.constant 0 : index
    %72 = vector.load %arg2[%c0_49, %c0_50] : memref<32x128xbf16, #tpu.memory_space<vmem>>, vector<32x128xbf16>
    %cst_51 = arith.constant dense<0.000000e+00> : vector<64x128xf32>
    %73 = tpu.matmul %71, %72, %cst_51 {dimension_numbers = #tpu.dot_dimension_numbers<[1], [0], [0], [1], [0, 0, 1, 1], [], []>} : vector<64x32xbf16>, vector<32x128xbf16>, vector<64x128xf32> -> vector<64x128xf32>
    %c0_52 = arith.constant 0 : index
    %c0_53 = arith.constant 0 : index
    %74 = vector.load %arg3[%c0_52, %c0_53] : memref<1x128xf32, #tpu.memory_space<vmem>>, vector<1x128xf32>
    %75 = vector.broadcast %74 : vector<1x128xf32> to vector<64x128xf32>
    %76 = arith.addf %73, %75 : vector<64x128xf32>
    %77 = math.tanh %76 : vector<64x128xf32>
    %78 = arith.truncf %77 : vector<64x128xf32> to vector<64x128xbf16>
    %c0_54 = arith.constant 0 : index
    %c0_55 = arith.constant 0 : index
    %79 = vector.load %arg4[%c0_54, %c0_55] : memref<128x32xbf16, #tpu.memory_space<vmem>>, vector<128x32xbf16>
    %cst_56 = arith.constant dense<0.000000e+00> : vector<64x32xf32>
    %80 = tpu.matmul %78, %79, %cst_56 {dimension_numbers = #tpu.dot_dimension_numbers<[1], [0], [0], [1], [0, 0, 1, 1], [], []>} : vector<64x128xbf16>, vector<128x32xbf16>, vector<64x32xf32> -> vector<64x32xf32>
    %c0_57 = arith.constant 0 : index
    %c0_58 = arith.constant 0 : index
    %81 = vector.load %arg5[%c0_57, %c0_58] : memref<1x32xf32, #tpu.memory_space<vmem>>, vector<1x32xf32>
    %82 = vector.broadcast %81 : vector<1x32xf32> to vector<64x32xf32>
    %83 = arith.addf %80, %82 : vector<64x32xf32>
    %84 = arith.addf %70, %83 : vector<64x32xf32>
    %85 = arith.truncf %84 : vector<64x32xf32> to vector<64x32xbf16>
    %c0_59 = arith.constant 0 : index
    %c0_60 = arith.constant 0 : index
    %86 = vector.load %arg6[%c0_59, %c0_60] : memref<32x128xbf16, #tpu.memory_space<vmem>>, vector<32x128xbf16>
    %cst_61 = arith.constant dense<0.000000e+00> : vector<64x128xf32>
    %87 = tpu.matmul %85, %86, %cst_61 {dimension_numbers = #tpu.dot_dimension_numbers<[1], [0], [0], [1], [0, 0, 1, 1], [], []>} : vector<64x32xbf16>, vector<32x128xbf16>, vector<64x128xf32> -> vector<64x128xf32>
    %c0_62 = arith.constant 0 : index
    %c0_63 = arith.constant 0 : index
    %88 = vector.load %arg7[%c0_62, %c0_63] : memref<1x128xf32, #tpu.memory_space<vmem>>, vector<1x128xf32>
    %89 = vector.broadcast %88 : vector<1x128xf32> to vector<64x128xf32>
    %90 = arith.addf %87, %89 : vector<64x128xf32>
    %91 = arith.truncf %90 : vector<64x128xf32> to vector<64x128xbf16>
    %c0_64 = arith.constant 0 : index
    %c0_65 = arith.constant 0 : index
    %92 = vector.load %arg8[%c0_64, %c0_65] : memref<64x128xbf16, #tpu.memory_space<vmem>>, vector<64x128xbf16>
    tpu.vector_store %arg8[%c0_64, %c0_65], %91 {strides = array<i32>} : memref<64x128xbf16, #tpu.memory_space<vmem>>, vector<64x128xbf16>,
    return
  }
  func.func @transform_0(%arg0: i32) -> (i32, i32, i32) {
    %c0_i32 = arith.constant 0 : i32
    %c0_i32_0 = arith.constant 0 : i32
    %c0_i32_1 = arith.constant 0 : i32
    return %c0_i32, %arg0, %c0_i32_0 : i32, i32, i32
  }
  func.func @transform_1(%arg0: i32) -> (i32, i32) {
    %c0_i32 = arith.constant 0 : i32
    %c0_i32_0 = arith.constant 0 : i32
    %c0_i32_1 = arith.constant 0 : i32
    return %c0_i32, %c0_i32_0 : i32, i32
  }
  func.func @transform_2(%arg0: i32) -> (i32, i32) {
    %c0_i32 = arith.constant 0 : i32
    %c0_i32_0 = arith.constant 0 : i32
    %c0_i32_1 = arith.constant 0 : i32
    return %c0_i32, %c0_i32_0 : i32, i32
  }
  func.func @transform_3(%arg0: i32) -> (i32, i32) {
    %c0_i32 = arith.constant 0 : i32
    %c0_i32_0 = arith.constant 0 : i32
    %c0_i32_1 = arith.constant 0 : i32
    return %c0_i32, %c0_i32_0 : i32, i32
  }
  func.func @transform_4(%arg0: i32) -> (i32, i32) {
    %c0_i32 = arith.constant 0 : i32
    %c0_i32_0 = arith.constant 0 : i32
    %c0_i32_1 = arith.constant 0 : i32
    return %c0_i32, %c0_i32_0 : i32, i32
  }
  func.func @transform_5(%arg0: i32) -> (i32, i32) {
    %c0_i32 = arith.constant 0 : i32
    %c0_i32_0 = arith.constant 0 : i32
    %c0_i32_1 = arith.constant 0 : i32
    return %c0_i32, %c0_i32_0 : i32, i32
  }
  func.func @transform_6(%arg0: i32) -> (i32, i32) {
    %c0_i32 = arith.constant 0 : i32
    %c0_i32_0 = arith.constant 0 : i32
    %c0_i32_1 = arith.constant 0 : i32
    return %c0_i32, %c0_i32_0 : i32, i32
  }
  func.func @transform_7(%arg0: i32) -> (i32, i32) {
    %c0_i32 = arith.constant 0 : i32
    %c0_i32_0 = arith.constant 0 : i32
    return %arg0, %c0_i32 : i32, i32
  }
}

</mosaic_0001>

<llo_original>
// kernel: tpu_custom_call.1
$region0: #{tpu_custom_call.1}
  #allocation0 [shape = 'u32[]', space=smem, size = 0x4, offset = 0x4, fixed_abs, tag = 'smem constant byte address 0x4 - core index']
  #allocation1 [shape = 'u32[144,128]{1,0:T(1,128)}', space=vmem, size = 0x12000, scoped, tag = 'internal scratch']
  #allocation2 [shape = 'f32[8,8,32]{2,1,0:T(8,128)}', space=vmem, size = 0x8000, scoped, tag = 'scratch operand']
  %s0 = inlined_call_operand.vmem [shape: f32[8,8,32], index: 0, kind: input, shape index: {}]
  %s1 = inlined_call_operand.vmem [shape: bf16[32,128], index: 1, kind: input, shape index: {}]
  %s2 = inlined_call_operand.vmem [shape: f32[1,128], index: 2, kind: input, shape index: {}]
  %s3 = inlined_call_operand.vmem [shape: bf16[128,32], index: 3, kind: input, shape index: {}]
  %s4 = inlined_call_operand.vmem [shape: f32[1,32], index: 4, kind: input, shape index: {}]
  %s5 = inlined_call_operand.hbm [shape: bf16[32,128], index: 5, kind: input, shape index: {}]
  %s6 = inlined_call_operand.vmem [shape: f32[1,128], index: 6, kind: input, shape index: {}]
  %s7 = inlined_call_operand.hbm [shape: bf16[64,128], index: 7, kind: output, shape index: {}]
  %s8 = sld [smem:[#allocation0]]
  $region42: #{tpu_custom_call.1} parent=0
    _
  %s10 = ssub.s32 1, %s8
  %s11 = scalar_select 0, %s10, %s8
  $region1: #{tpu_custom_call.1} parent=0
    #allocation3 [shape = 'u8[8192]{0}', space=vmem, size = 0x2000, scoped, tag = 'input window, operand 5, single buffered']
    #allocation4 [shape = 's32[1]{0}', space=sflag, size = 0x4, scoped, tag = 'scoped memory for tpu_custom_call.1']
    #allocation5 [shape = 's32[1]{0}', space=sflag, size = 0x4, scoped, tag = 'scoped memory for tpu_custom_call.1']
    #allocation6 [shape = 'u8[16384]{0}', space=vmem, size = 0x4000, scoped, tag = 'output window, operand 0, single buffered']
    %12 = vsyncpa [#allocation4], 0
    %13 = vsyncpa [#allocation5], 0
    // Predicated region
    $region2: #{tpu_custom_call.1} parent=1 // pred_check
      _
    $region3: #{tpu_custom_call.1} parent=1 // pred_check_branch
      %15 = sbr.rel (0) target = $region5
    $region4: #{tpu_custom_call.1} parent=1 // pred_region
      _
    $region5: #{tpu_custom_call.1} parent=1 // pred_fallthru
      _
    // Predicated region
    $region6: #{tpu_custom_call.1} parent=1 // pred_check
      _
    $region7: #{tpu_custom_call.1} parent=1 // pred_check_branch
      %17 = sbr.rel (0) target = $region9
    $region8: #{tpu_custom_call.1} parent=1 // pred_region
      _
    $region9: #{tpu_custom_call.1} parent=1 // pred_fallthru
      _
    // Predicated region
    $region10: #{tpu_custom_call.1} parent=1 // pred_check
      _
    $region11: #{tpu_custom_call.1} parent=1 // pred_check_branch
      %19 = sbr.rel (0) target = $region13
    $region12: #{tpu_custom_call.1} parent=1 // pred_region
      _
    $region13: #{tpu_custom_call.1} parent=1 // pred_fallthru
      _
    // Predicated region
    $region14: #{tpu_custom_call.1} parent=1 // pred_check
      _
    $region15: #{tpu_custom_call.1} parent=1 // pred_check_branch
      %21 = sbr.rel (0) target = $region17
    $region16: #{tpu_custom_call.1} parent=1 // pred_region
      _
    $region17: #{tpu_custom_call.1} parent=1 // pred_fallthru
      _
    // Predicated region
    $region18: #{tpu_custom_call.1} parent=1 // pred_check
      _
    $region19: #{tpu_custom_call.1} parent=1 // pred_check_branch
      %23 = sbr.rel (0) target = $region21
    $region20: #{tpu_custom_call.1} parent=1 // pred_region
      _
    $region21: #{tpu_custom_call.1} parent=1 // pred_fallthru
      _
    // Predicated region
    $region22: #{tpu_custom_call.1} parent=1 // pred_check
      _
    $region23: #{tpu_custom_call.1} parent=1 // pred_check_branch
      %25 = sbr.rel (0) target = $region25
    $region24: #{tpu_custom_call.1} parent=1 // pred_region
      %s27 = ssub.s32 256, 256
      %28 = vsyncadd [#allocation4], %s27
      %s29 = sshll.u32 [#allocation3], 4
      %s30 = int_to_ptr.vmem [resolvable:$true] %s29
      %35 = dma.hbm_to_vmem [thread:$0]  %s5, 256, %s30, [#allocation4], 64, 64, 4
    $region25: #{tpu_custom_call.1} parent=1 // pred_fallthru
      _
    // Predicated region
    $region26: #{tpu_custom_call.1} parent=1 // pred_check
      _
    $region27: #{tpu_custom_call.1} parent=1 // pred_check_branch
      %37 = sbr.rel (0) target = $region29
    $region28: #{tpu_custom_call.1} parent=1 // pred_region
      _
    $region29: #{tpu_custom_call.1} parent=1 // pred_fallthru
      _
    // Predicated region
    $region30: #{tpu_custom_call.1} parent=1 // pred_check
      _
    $region31: #{tpu_custom_call.1} parent=1 // pred_check_branch
      %39 = sbr.rel (0) target = $region33
    $region32: #{tpu_custom_call.1} parent=1 // pred_region
      %40 = dma.done [#allocation4], 256
    $region33: #{tpu_custom_call.1} parent=1 // pred_fallthru
      _
    %v42 = vld [vmem:[%s0] sm:$0xff]
    %v43 = vadd.f32 %v42, %v42
    %vm44 = vcmask 261120
    %45 = vst.msk [vmem:[#allocation2] sm:$0xff] %vm44, %v43
    %s46 = scalar_lea.vmem %s0, 8
    %v47 = vld [vmem:[%s46] sm:$0xff]
    %v48 = vadd.f32 %v42, %v47
    %v49 = vmul.f32 %v48, 0.5
    %v50 = vadd.f32 %v47, %v49
    %s51 = scalar_lea.vmem [#allocation2], 8
    %52 = vst.msk [vmem:[%s51] sm:$0xff] %vm44, %v50
    %s53 = scalar_lea.vmem %s0, 16
    %v54 = vld [vmem:[%s53] sm:$0xff]
    %v55 = vadd.f32 %v48, %v54
    %v56 = vmul.f32 %v55, 0.33333334
    %v57 = vadd.f32 %v54, %v56
    %s58 = scalar_lea.vmem [#allocation2], 16
    %59 = vst.msk [vmem:[%s58] sm:$0xff] %vm44, %v57
    %s60 = scalar_lea.vmem %s0, 24
    %v61 = vld [vmem:[%s60] sm:$0xff]
    %v62 = vadd.f32 %v55, %v61
    %v63 = vmul.f32 %v62, 0.25
    %v64 = vadd.f32 %v61, %v63
    %s65 = scalar_lea.vmem [#allocation2], 24
    %66 = vst.msk [vmem:[%s65] sm:$0xff] %vm44, %v64
    %s67 = scalar_lea.vmem %s0, 32
    %v68 = vld [vmem:[%s67] sm:$0xff]
    %v69 = vadd.f32 %v62, %v68
    %v70 = vmul.f32 %v69, 0.2
    %v71 = vadd.f32 %v68, %v70
    %s72 = scalar_lea.vmem [#allocation2], 32
    %73 = vst.msk [vmem:[%s72] sm:$0xff] %vm44, %v71
    %s74 = scalar_lea.vmem %s0, 40
    %v75 = vld [vmem:[%s74] sm:$0xff]
    %v76 = vadd.f32 %v69, %v75
    %v77 = vmul.f32 %v76, 0.16666667
    %v78 = vadd.f32 %v75, %v77
    %s79 = scalar_lea.vmem [#allocation2], 40
    %80 = vst.msk [vmem:[%s79] sm:$0xff] %vm44, %v78
    %s81 = scalar_lea.vmem %s0, 48
    %v82 = vld [vmem:[%s81] sm:$0xff]
    %v83 = vadd.f32 %v76, %v82
    %v84 = vmul.f32 %v83, 0.14285715
    %v85 = vadd.f32 %v82, %v84
    %s86 = scalar_lea.vmem [#allocation2], 48
    %87 = vst.msk [vmem:[%s86] sm:$0xff] %vm44, %v85
    %s88 = scalar_lea.vmem %s0, 56
    %v89 = vld [vmem:[%s88] sm:$0xff]
    %v90 = vadd.f32 %v83, %v89
    %v91 = vmul.f32 %v90, 0.125
    %v92 = vadd.f32 %v89, %v91
    %s93 = scalar_lea.vmem [#allocation2], 56
    %94 = vst.msk [vmem:[%s93] sm:$0xff] %vm44, %v92
    %v95 = vld [vmem:[#allocation2] sm:$0xff]
    %v96 = vld [vmem:[#allocation2 + $0x8] sm:$0xff]
    %v97 = vld [vmem:[#allocation2 + $0x10] sm:$0xff]
    %v98 = vld [vmem:[#allocation2 + $0x18] sm:$0xff]
    %v99 = vld [vmem:[#allocation2 + $0x20] sm:$0xff]
    %v100 = vld [vmem:[#allocation2 + $0x28] sm:$0xff]
    %v101 = vld [vmem:[#allocation2 + $0x30] sm:$0xff]
    %v102 = vld [vmem:[#allocation2 + $0x38] sm:$0xff]
    %v103 = vpack.c.bf16 %v96, %v95
    %v104 = vpack.c.bf16 %v98, %v97
    %v105 = vpack.c.bf16 %v100, %v99
    %v106 = vpack.c.bf16 %v102, %v101
    %v107 = vld [vmem:[%s1] sm:$0xf]
    %v108 = vld [vmem:[%s1 + $0x4] sm:$0xf]
    %v109 = vld [vmem:[%s1 + $0x8] sm:$0xf]
    %v110 = vld [vmem:[%s1 + $0xc] sm:$0xf]
    %v111 = vld [vmem:[%s2] sm:$0x1]
    %v113 = vlaneseq
    %v114 = vshrl.u32 %v113, 7
    %v115 = vsub.s32 0, %v114
    %v116 = vrot.slane %v111, %v115
    %v122 = vunpack.c.l.b16 %v107
    %v123 = vunpack.c.l.b16 %v108
    %v124 = vunpack.c.l.b16 %v109
    %v125 = vunpack.c.l.b16 %v110
    %v126 = vpack.c.b16 %v123, %v122
    %v127 = vpack.c.b16 %v125, %v124
    %v131 = vsel %vm44, %v103, 0
    %v134 = vsel %vm44, %v104, 0
    %v137 = vsel %vm44, %v105, 0
    %v140 = vsel %vm44, %v106, 0
    %142 = vmatprep.subr.bf16.mxu0 0
    %143 = vmatpush1.bf16.msra.mxu0 0
    %144 = vmatprep.subr.bf16.mxu0 0
    %145 = vmatpush1.bf16.msra.mxu0 0
    %146 = vmatprep.subr.bf16.mxu0 0
    %147 = vmatpush1.bf16.msra.mxu0 0
    %148 = vmatprep.subr.bf16.mxu0 0
    %149 = vmatpush1.bf16.msra.mxu0 0
    %150 = vmatprep.subr.bf16.mxu0 0
    %151 = vmatpush1.bf16.msra.mxu0 0
    %152 = vmatprep.subr.bf16.mxu0 0
    %153 = vmatpush1.bf16.msra.mxu0 0
    %154 = vmatprep.subr.bf16.mxu0 0
    %155 = vmatpush1.bf16.msra.mxu0 %v127
    %156 = vmatprep.subr.bf16.mxu0 0
    %157 = vmatpush1.bf16.msra.mxu0 %v126
    %158 = vmatprep.subr.bf16.mxu0 0
    %159 = vmatpush2.bf16.msra.mxu0 0
    %160 = vmatprep.subr.bf16.mxu0 0
    %161 = vmatpush2.bf16.msra.mxu0 0
    %162 = vmatprep.subr.bf16.mxu0 0
    %163 = vmatpush2.bf16.msra.mxu0 0
    %164 = vmatprep.subr.bf16.mxu0 0
    %165 = vmatpush2.bf16.msra.mxu0 0
    %166 = vmatprep.subr.bf16.mxu0 0
    %167 = vmatpush2.bf16.msra.mxu0 0
    %168 = vmatprep.subr.bf16.mxu0 0
    %169 = vmatpush2.bf16.msra.mxu0 0
    %170 = vmatprep.subr.bf16.mxu0 0
    %171 = vmatpush2.bf16.msra.mxu0 0
    %172 = vmatprep.subr.bf16.mxu0 0
    %173 = vmatpush2.bf16.msra.mxu0 0
    %174 = vmatprep.mubr.bf16.mxu0 0
    %175 = vmatmul.mubr.bf16.gmra.mxu0 %v131
    %v176 = vpop.f32.mrf.mxu0
    %v177 = vadd.f32 %v116, %v176
    %v178 = vpop.f32.mrf.mxu0
    %v179 = vpop.f32.mrf.mxu0
    %v180 = vadd.f32 %v116, %v179
    %v181 = vpop.f32.mrf.mxu0
    %182 = vmatprep.mubr.bf16.mxu0 0
    %183 = vmatmul.mubr.bf16.gmra.mxu0 %v134
    %v184 = vpop.f32.mrf.mxu0
    %v185 = vadd.f32 %v116, %v184
    %v186 = vpop.f32.mrf.mxu0
    %v187 = vpop.f32.mrf.mxu0
    %v188 = vadd.f32 %v116, %v187
    %v189 = vpop.f32.mrf.mxu0
    %190 = vmatprep.mubr.bf16.mxu0 0
    %191 = vmatmul.mubr.bf16.gmra.mxu0 %v137
    %v192 = vpop.f32.mrf.mxu0
    %v193 = vadd.f32 %v116, %v192
    %v194 = vpop.f32.mrf.mxu0
    %v195 = vpop.f32.mrf.mxu0
    %v196 = vadd.f32 %v116, %v195
    %v197 = vpop.f32.mrf.mxu0
    %198 = vmatprep.mubr.bf16.mxu0 0
    %199 = vmatmul.mubr.bf16.gmra.mxu0 %v140
    %v200 = vpop.f32.mrf.mxu0
    %v201 = vadd.f32 %v116, %v200
    %v202 = vpop.f32.mrf.mxu0
    %v203 = vpop.f32.mrf.mxu0
    %v204 = vadd.f32 %v116, %v203
    %v205 = vpop.f32.mrf.mxu0
    %206 = vdwg.mxu0
    %v207 = vtanh.pop %v177
    %v208 = vtanh.pop %v180
    %v209 = vtanh.pop %v185
    %v210 = vtanh.pop %v188
    %v211 = vtanh.pop %v193
    %v212 = vtanh.pop %v196
    %v213 = vtanh.pop %v201
    %v214 = vtanh.pop %v204
    %v215 = vpack.c.bf16 %v208, %v207
    %v216 = vpack.c.bf16 %v210, %v209
    %v217 = vpack.c.bf16 %v212, %v211
    %v218 = vpack.c.bf16 %v214, %v213
    %v219 = vld [vmem:[%s3] sm:$0xf]
    %v220 = vld [vmem:[%s3 + $0x4] sm:$0xf]
    %v221 = vld [vmem:[%s3 + $0x8] sm:$0xf]
    %v222 = vld [vmem:[%s3 + $0xc] sm:$0xf]
    %v223 = vld [vmem:[%s3 + $0x10] sm:$0xf]
    %v224 = vld [vmem:[%s3 + $0x14] sm:$0xf]
    %v225 = vld [vmem:[%s3 + $0x18] sm:$0xf]
    %v226 = vld [vmem:[%s3 + $0x1c] sm:$0xf]
    %v227 = vld [vmem:[%s3 + $0x20] sm:$0xf]
    %v228 = vld [vmem:[%s3 + $0x24] sm:$0xf]
    %v229 = vld [vmem:[%s3 + $0x28] sm:$0xf]
    %v230 = vld [vmem:[%s3 + $0x2c] sm:$0xf]
    %v231 = vld [vmem:[%s3 + $0x30] sm:$0xf]
    %v232 = vld [vmem:[%s3 + $0x34] sm:$0xf]
    %v233 = vld [vmem:[%s3 + $0x38] sm:$0xf]
    %v234 = vld [vmem:[%s3 + $0x3c] sm:$0xf]
    %v235 = vld [vmem:[%s4] sm:$0x1]
    %v237 = vlaneseq
    %v238 = vshrl.u32 %v237, 7
    %v239 = vsub.s32 0, %v238
    %v240 = vrot.slane %v235, %v239
    %v258 = vunpack.c.l.b16 %v219
    %v259 = vunpack.c.l.b16 %v220
    %v260 = vunpack.c.l.b16 %v221
    %v261 = vunpack.c.l.b16 %v222
    %v262 = vunpack.c.l.b16 %v223
    %v263 = vunpack.c.l.b16 %v224
    %v264 = vunpack.c.l.b16 %v225
    %v265 = vunpack.c.l.b16 %v226
    %v266 = vunpack.c.l.b16 %v227
    %v267 = vunpack.c.l.b16 %v228
    %v268 = vunpack.c.l.b16 %v229
    %v269 = vunpack.c.l.b16 %v230
    %v270 = vunpack.c.l.b16 %v231
    %v271 = vunpack.c.l.b16 %v232
    %v272 = vunpack.c.l.b16 %v233
    %v273 = vunpack.c.l.b16 %v234
    %v274 = vpack.c.b16 %v259, %v258
    %v275 = vpack.c.b16 %v261, %v260
    %v276 = vpack.c.b16 %v263, %v262
    %v277 = vpack.c.b16 %v265, %v264
    %v278 = vpack.c.b16 %v267, %v266
    %v279 = vpack.c.b16 %v269, %v268
    %v280 = vpack.c.b16 %v271, %v270
    %v281 = vpack.c.b16 %v273, %v272
    %290 = vmatprep.subr.bf16.mxu0 0
    %291 = vmatpush1.bf16.msra.mxu0 %v281
    %292 = vmatprep.subr.bf16.mxu0 0
    %293 = vmatpush1.bf16.msra.mxu0 %v280
    %294 = vmatprep.subr.bf16.mxu0 0
    %295 = vmatpush1.bf16.msra.mxu0 %v279
    %296 = vmatprep.subr.bf16.mxu0 0
    %297 = vmatpush1.bf16.msra.mxu0 %v278
    %298 = vmatprep.subr.bf16.mxu0 0
    %299 = vmatpush1.bf16.msra.mxu0 %v277
    %300 = vmatprep.subr.bf16.mxu0 0
    %301 = vmatpush1.bf16.msra.mxu0 %v276
    %302 = vmatprep.subr.bf16.mxu0 0
    %303 = vmatpush1.bf16.msra.mxu0 %v275
    %304 = vmatprep.subr.bf16.mxu0 0
    %305 = vmatpush1.bf16.msra.mxu0 %v274
    %306 = vmatprep.subr.bf16.mxu0 0
    %307 = vmatpush2.bf16.msra.mxu0 0
    %308 = vmatprep.subr.bf16.mxu0 0
    %309 = vmatpush2.bf16.msra.mxu0 0
    %310 = vmatprep.subr.bf16.mxu0 0
    %311 = vmatpush2.bf16.msra.mxu0 0
    %312 = vmatprep.subr.bf16.mxu0 0
    %313 = vmatpush2.bf16.msra.mxu0 0
    %314 = vmatprep.subr.bf16.mxu0 0
    %315 = vmatpush2.bf16.msra.mxu0 0
    %316 = vmatprep.subr.bf16.mxu0 0
    %317 = vmatpush2.bf16.msra.mxu0 0
    %318 = vmatprep.subr.bf16.mxu0 0
    %319 = vmatpush2.bf16.msra.mxu0 0
    %320 = vmatprep.subr.bf16.mxu0 0
    %321 = vmatpush2.bf16.msra.mxu0 0
    %322 = vmatprep.mubr.bf16.mxu0 0
    %323 = vmatmul.mubr.bf16.gmra.mxu0 %v215
    %v324 = vpop.f32.mrf.mxu0
    %v325 = vadd.f32 %v240, %v324
    %v326 = vpop.f32.mrf.mxu0
    %v327 = vpop.f32.mrf.mxu0
    %v328 = vadd.f32 %v240, %v327
    %v329 = vpop.f32.mrf.mxu0
    %330 = vmatprep.mubr.bf16.mxu0 0
    %331 = vmatmul.mubr.bf16.gmra.mxu0 %v216
    %v332 = vpop.f32.mrf.mxu0
    %v333 = vadd.f32 %v240, %v332
    %v334 = vpop.f32.mrf.mxu0
    %v335 = vpop.f32.mrf.mxu0
    %v336 = vadd.f32 %v240, %v335
    %v337 = vpop.f32.mrf.mxu0
    %338 = vmatprep.mubr.bf16.mxu0 0
    %339 = vmatmul.mubr.bf16.gmra.mxu0 %v217
    %v340 = vpop.f32.mrf.mxu0
    %v341 = vadd.f32 %v240, %v340
    %v342 = vpop.f32.mrf.mxu0
    %v343 = vpop.f32.mrf.mxu0
    %v344 = vadd.f32 %v240, %v343
    %v345 = vpop.f32.mrf.mxu0
    %346 = vmatprep.mubr.bf16.mxu0 0
    %347 = vmatmul.mubr.bf16.gmra.mxu0 %v218
    %v348 = vpop.f32.mrf.mxu0
    %v349 = vadd.f32 %v240, %v348
    %v350 = vpop.f32.mrf.mxu0
    %v351 = vpop.f32.mrf.mxu0
    %v352 = vadd.f32 %v240, %v351
    %v353 = vpop.f32.mrf.mxu0
    %354 = vdwg.mxu0
    %v355 = vadd.f32 %v95, %v325
    %v356 = vadd.f32 %v96, %v328
    %v357 = vadd.f32 %v97, %v333
    %v358 = vadd.f32 %v98, %v336
    %v359 = vadd.f32 %v99, %v341
    %v360 = vadd.f32 %v100, %v344
    %v361 = vadd.f32 %v101, %v349
    %v362 = vadd.f32 %v102, %v352
    %v363 = vpack.c.bf16 %v356, %v355
    %v364 = vpack.c.bf16 %v358, %v357
    %v365 = vpack.c.bf16 %v360, %v359
    %v366 = vpack.c.bf16 %v362, %v361
    %v367 = vld [vmem:[#allocation3] sm:$0xf]
    %v368 = vld [vmem:[#allocation3 + $0x4] sm:$0xf]
    %v369 = vld [vmem:[#allocation3 + $0x8] sm:$0xf]
    %v370 = vld [vmem:[#allocation3 + $0xc] sm:$0xf]
    %v371 = vld [vmem:[%s6] sm:$0x1]
    %v373 = vlaneseq
    %v374 = vshrl.u32 %v373, 7
    %v375 = vsub.s32 0, %v374
    %v376 = vrot.slane %v371, %v375
    %v382 = vunpack.c.l.b16 %v367
    %v383 = vunpack.c.l.b16 %v368
    %v384 = vunpack.c.l.b16 %v369
    %v385 = vunpack.c.l.b16 %v370
    %v386 = vpack.c.b16 %v383, %v382
    %v387 = vpack.c.b16 %v385, %v384
    %v391 = vsel %vm44, %v363, 0
    %v394 = vsel %vm44, %v364, 0
    %v397 = vsel %vm44, %v365, 0
    %v400 = vsel %vm44, %v366, 0
    %402 = vmatprep.subr.bf16.mxu0 0
    %403 = vmatpush1.bf16.msra.mxu0 0
    %404 = vmatprep.subr.bf16.mxu0 0
    %405 = vmatpush1.bf16.msra.mxu0 0
    %406 = vmatprep.subr.bf16.mxu0 0
    %407 = vmatpush1.bf16.msra.mxu0 0
    %408 = vmatprep.subr.bf16.mxu0 0
    %409 = vmatpush1.bf16.msra.mxu0 0
    %410 = vmatprep.subr.bf16.mxu0 0
    %411 = vmatpush1.bf16.msra.mxu0 0
    %412 = vmatprep.subr.bf16.mxu0 0
    %413 = vmatpush1.bf16.msra.mxu0 0
    %414 = vmatprep.subr.bf16.mxu0 0
    %415 = vmatpush1.bf16.msra.mxu0 %v387
    %416 = vmatprep.subr.bf16.mxu0 0
    %417 = vmatpush1.bf16.msra.mxu0 %v386
    %418 = vmatprep.subr.bf16.mxu0 0
    %419 = vmatpush2.bf16.msra.mxu0 0
    %420 = vmatprep.subr.bf16.mxu0 0
    %421 = vmatpush2.bf16.msra.mxu0 0
    %422 = vmatprep.subr.bf16.mxu0 0
    %423 = vmatpush2.bf16.msra.mxu0 0
    %424 = vmatprep.subr.bf16.mxu0 0
    %425 = vmatpush2.bf16.msra.mxu0 0
    %426 = vmatprep.subr.bf16.mxu0 0
    %427 = vmatpush2.bf16.msra.mxu0 0
    %428 = vmatprep.subr.bf16.mxu0 0
    %429 = vmatpush2.bf16.msra.mxu0 0
    %430 = vmatprep.subr.bf16.mxu0 0
    %431 = vmatpush2.bf16.msra.mxu0 0
    %432 = vmatprep.subr.bf16.mxu0 0
    %433 = vmatpush2.bf16.msra.mxu0 0
    %434 = vmatprep.mubr.bf16.mxu0 0
    %435 = vmatmul.mubr.bf16.gmra.mxu0 %v391
    %v436 = vpop.f32.mrf.mxu0
    %v437 = vadd.f32 %v376, %v436
    %v438 = vpop.f32.mrf.mxu0
    %v439 = vpop.f32.mrf.mxu0
    %v440 = vadd.f32 %v376, %v439
    %v441 = vpop.f32.mrf.mxu0
    %442 = vmatprep.mubr.bf16.mxu0 0
    %443 = vmatmul.mubr.bf16.gmra.mxu0 %v394
    %v444 = vpop.f32.mrf.mxu0
    %v445 = vadd.f32 %v376, %v444
    %v446 = vpop.f32.mrf.mxu0
    %v447 = vpop.f32.mrf.mxu0
    %v448 = vadd.f32 %v376, %v447
    %v449 = vpop.f32.mrf.mxu0
    %450 = vmatprep.mubr.bf16.mxu0 0
    %451 = vmatmul.mubr.bf16.gmra.mxu0 %v397
    %v452 = vpop.f32.mrf.mxu0
    %v453 = vadd.f32 %v376, %v452
    %v454 = vpop.f32.mrf.mxu0
    %v455 = vpop.f32.mrf.mxu0
    %v456 = vadd.f32 %v376, %v455
    %v457 = vpop.f32.mrf.mxu0
    %458 = vmatprep.mubr.bf16.mxu0 0
    %459 = vmatmul.mubr.bf16.gmra.mxu0 %v400
    %v460 = vpop.f32.mrf.mxu0
    %v461 = vadd.f32 %v376, %v460
    %v462 = vpop.f32.mrf.mxu0
    %v463 = vpop.f32.mrf.mxu0
    %v464 = vadd.f32 %v376, %v463
    %v465 = vpop.f32.mrf.mxu0
    %466 = vdwg.mxu0
    %v467 = vpack.c.bf16 %v440, %v437
    %v468 = vpack.c.bf16 %v448, %v445
    %v469 = vpack.c.bf16 %v456, %v453
    %v470 = vpack.c.bf16 %v464, %v461
    %v475 = vunpack.c.l.b16 %v467
    %v476 = vunpack.c.h.b16 %v467
    %v477 = vunpack.c.l.b16 %v468
    %v478 = vunpack.c.h.b16 %v468
    %v479 = vunpack.c.l.b16 %v469
    %v480 = vunpack.c.h.b16 %v469
    %v481 = vunpack.c.l.b16 %v470
    %v482 = vunpack.c.h.b16 %v470
    %v483 = vpack.c.b16 %v475, %v475
    %v484 = vpack.c.b16 %v476, %v476
    %v485 = vpack.c.b16 %v477, %v477
    %v486 = vpack.c.b16 %v478, %v478
    %v487 = vpack.c.b16 %v479, %v479
    %v488 = vpack.c.b16 %v480, %v480
    %v489 = vpack.c.b16 %v481, %v481
    %v490 = vpack.c.b16 %v482, %v482
    %499 = vst [vmem:[#allocation6] sm:$0xf] %v483
    %500 = vst [vmem:[#allocation6 + $0x4] sm:$0xf] %v484
    %501 = vst [vmem:[#allocation6 + $0x8] sm:$0xf] %v485
    %502 = vst [vmem:[#allocation6 + $0xc] sm:$0xf] %v486
    %503 = vst [vmem:[#allocation6 + $0x10] sm:$0xf] %v487
    %504 = vst [vmem:[#allocation6 + $0x14] sm:$0xf] %v488
    %505 = vst [vmem:[#allocation6 + $0x18] sm:$0xf] %v489
    %506 = vst [vmem:[#allocation6 + $0x1c] sm:$0xf] %v490
    // Predicated region
    $region34: #{tpu_custom_call.1} parent=1 // pred_check
      _
    $region35: #{tpu_custom_call.1} parent=1 // pred_check_branch
      %508 = sbr.rel (0) target = $region37
    $region36: #{tpu_custom_call.1} parent=1 // pred_region
      %s510 = ssub.s32 512, 512
      %511 = vsyncadd [#allocation5], %s510
      %s512 = sshll.u32 [#allocation6], 4
      %s513 = int_to_ptr.vmem [resolvable:$true] %s512
      %518 = dma.vmem_to_hbm [thread:$0]  %s513, 512, %s7, [#allocation5], 64, 64, 4
    $region37: #{tpu_custom_call.1} parent=1 // pred_fallthru
      _
    // Predicated region
    $region38: #{tpu_custom_call.1} parent=1 // pred_check
      _
    $region39: #{tpu_custom_call.1} parent=1 // pred_check_branch
      %520 = sbr.rel (0) target = $region41
    $region40: #{tpu_custom_call.1} parent=1 // pred_region
      %521 = dma.done [#allocation5], 512
    $region41: #{tpu_custom_call.1} parent=1 // pred_fallthru
      _
    %522 = vsyncpa [#allocation4], 1
    %523 = vsyncpa [#allocation5], 1

</llo_original>
